<compile_context>
chip_gen: v5e
topology: v5e:2x2
jax: 0.10.0
libtpu: 0.0.40
codegen_flags: <defaults>
</compile_context>

<pallas_src>
import functools

import jax
import jax.numpy as jnp
from jax.experimental import pallas as pl
from jax.experimental.pallas import tpu as pltpu

_LANE = 128


def _adain_kernel(c_ref, s_ref, o_ref, *, eps, n_channels):
    # Tiles are (C, TM): channel axis on sublanes, spatial axis on lanes.
    # Upcast to f32 so mean/variance match torch even for bf16/fp8 inputs.
    c = c_ref[...].astype(jnp.float32)
    s = s_ref[...].astype(jnp.float32)
    inv_cm1 = 1.0 / (n_channels - 1)  # unbiased (ddof=1) normalizer

    # Content stats over the channel axis (dim=1 of NCHW == axis 0 of the tile).
    c_mean = jnp.mean(c, axis=0, keepdims=True)
    d = c - c_mean
    c_var = jnp.sum(d * d, axis=0, keepdims=True) * inv_cm1
    c_std = jnp.sqrt(c_var)
    del d  # (c - c_mean) is recomputed in the epilogue -> temp dies here

    # Style stats over the channel axis.
    s_mean = jnp.mean(s, axis=0, keepdims=True)
    sd = s - s_mean
    s_var = jnp.sum(sd * sd, axis=0, keepdims=True) * inv_cm1
    s_std = jnp.sqrt(s_var)
    del sd

    # Fused epilogue: (c - mean_c) / (std_c + eps) * std_s + mean_s
    # Per-lane (1, TM) reciprocal + multiply instead of a full-tile divide.
    # approx=False keeps the 1e-5 tolerance; the operand is tiny anyway.
    scale = s_std * pl.reciprocal(c_std + eps, approx=False)
    o_ref[...] = ((c - c_mean) * scale + s_mean).astype(o_ref.dtype)


def _tpu_vmem_and_cores():
    """Physical VMEM bytes and a 'two TensorCores' flag, with safe fallbacks."""
    vmem_bytes = 64 * 1024 * 1024  # conservative default = v7x per-TC VMEM
    try:
        info = pltpu.get_tpu_info()
        v = int(getattr(info, "vmem_capacity_bytes", 0) or 0)
        if v > 0:
            vmem_bytes = v
    except Exception:
        pass
    # v5e/v6e (128 MiB VMEM) are single-TC parts; v7x (64 MiB per TC) has two.
    two_tc = vmem_bytes <= 64 * 1024 * 1024
    return vmem_bytes, two_tc


def _pick_tile_m(n_batch, n_channels, hw, dtype_bytes, vmem_bytes, two_tc):
    """Pick the lane tile (multiple of 128, or the full H*W extent)."""
    # Pipeline footprint per lane: 3 streams x 2 buffers in the input dtype,
    # plus ~2 block-sized f32 in-kernel temporaries, within half of VMEM.
    budget = vmem_bytes // 2
    per_lane_bytes = n_channels * (6 * dtype_bytes + 2 * 4)
    vmem_cap = max(_LANE, budget // per_lane_bytes)
    # Byte-based per-block cap (~4 MiB per array per buffer): keeps every grid
    # step several microseconds of DMA (amortizes ~0.35us/step overhead) for
    # both small-C and large-C shapes; C=512 still lands around 2048 lanes.
    byte_cap = max(_LANE, (4 * 1024 * 1024) // (n_channels * dtype_bytes))
    tile = max(_LANE, (min(vmem_cap, byte_cap) // _LANE) * _LANE)

    if tile >= hw:
        tile = hw  # single full-extent lane block (legal even if hw % 128 != 0)

    if two_tc and hw > _LANE:
        # v7x: keep both TensorCores fed -- aim for an even step count >= 2
        # along the parallel grid axes. Lane axis splits in 128-lane units.
        def n_steps(t):
            return n_batch * ((hw + t - 1) // t)

        if n_steps(tile) < 2 or n_steps(tile) % 2:
            t = (min(tile, hw) // _LANE) * _LANE
            while t >= _LANE:
                if n_steps(t) >= 2 and n_steps(t) % 2 == 0:
                    tile = t
                    break
                t -= _LANE
    return tile


def adain(c, s, eps=1e-08, tile_m=None):
    """c, s: float arrays of shape (N, C, H, W). Returns same shape."""
    assert c.shape == s.shape and c.dtype == s.dtype
    N, C, H, W = c.shape
    if C < 2:
        raise ValueError("AdaIn with unbiased std (ddof=1) requires C >= 2")
    HW = H * W

    c3 = c.reshape(N, C, HW)
    s3 = s.reshape(N, C, HW)

    vmem_bytes, two_tc = _tpu_vmem_and_cores()
    if tile_m is None:
        tile_m = _pick_tile_m(N, C, HW, jnp.dtype(c.dtype).itemsize,
                              vmem_bytes, two_tc)

    grid = (N, pl.cdiv(HW, tile_m))
    # Leading batch dim is squeezed out of the kernel Ref -> kernel sees (C, TM).
    # The last lane block may be ragged; Pallas masks the edge store, and the
    # channel (sublane) reduction cannot mix data across lanes.
    blk = pl.BlockSpec((None, C, tile_m), lambda n, m: (n, 0, m))

    out = pl.pallas_call(
        functools.partial(_adain_kernel, eps=eps, n_channels=C),
        out_shape=jax.ShapeDtypeStruct((N, C, HW), c.dtype),
        grid_spec=pltpu.PrefetchScalarGridSpec(
            num_scalar_prefetch=0,
            grid=grid,
            in_specs=[blk, blk],
            out_specs=blk,
        ),
        compiler_params=pltpu.CompilerParams(
            dimension_semantics=("parallel", "parallel"),
            vmem_limit_bytes=int(vmem_bytes * 3 // 4),
        ),
    )(c3, s3)

    return out.reshape(N, C, H, W)


def adain_reference(c, s, eps=1e-08):
    """Plain-JAX reference matching torch semantics (unbiased std over dim=1)."""
    c_mean = jnp.mean(c, axis=1, keepdims=True)
    c_std = jnp.std(c, axis=1, keepdims=True, ddof=1)
    s_mean = jnp.mean(s, axis=1, keepdims=True)
    s_std = jnp.std(s, axis=1, keepdims=True, ddof=1)
    x = (c - c_mean) / (c_std + eps)
    return x * s_std + s_mean


if __name__ == "__main__":
    key = jax.random.PRNGKey(0)
    kc, ks, kc2, ks2, kc3, ks3 = jax.random.split(key, 6)

    # Primary small test shape consistent with the module.
    N, C, H, W = 2, 4, 16, 16
    c = jax.random.normal(kc, (N, C, H, W), dtype=jnp.float32)
    s = jax.random.normal(ks, (N, C, H, W), dtype=jnp.float32) * 2.0 + 0.5

    out = jax.block_until_ready(adain(c, s))
    ref = adain_reference(c, s)
    assert out.shape == (N, C, H, W)
    assert jnp.allclose(out, ref, atol=1e-5, rtol=1e-5), "mismatch vs reference"

    # H*W < 128: single full-extent lane block (non-128 last dim).
    c2 = jax.random.normal(kc2, (2, 4, 10, 10), dtype=jnp.float32)
    s2 = jax.random.normal(ks2, (2, 4, 10, 10), dtype=jnp.float32) * 0.7 - 1.0
    out2 = jax.block_until_ready(adain(c2, s2))
    ref2 = adain_reference(c2, s2)
    assert jnp.allclose(out2, ref2, atol=1e-5, rtol=1e-5), "mismatch (small HW)"

    # Ragged last lane block: H*W = 144 with tile_m forced to 128 exercises the
    # Pallas masked edge-store path (no wrapper pad/slice anymore).
    c3_in = jax.random.normal(kc3, (2, 4, 12, 12), dtype=jnp.float32)
    s3_in = jax.random.normal(ks3, (2, 4, 12, 12), dtype=jnp.float32) * 1.3 + 0.2
    out3 = jax.block_until_ready(adain(c3_in, s3_in, tile_m=128))
    ref3 = adain_reference(c3_in, s3_in)
    assert jnp.allclose(out3, ref3, atol=1e-5, rtol=1e-5), "mismatch (ragged edge)"

    print("KERNEL_OK")
</pallas_src>

<mosaic_0001>
module attributes {stable_mosaic.version = 11 : i64} {
  func.func @_adain_kernel(%arg0: i32, %arg1: i32, %arg2: memref<1x4x256xf32, #tpu.memory_space<vmem>>, %arg3: memref<1x4x256xf32, #tpu.memory_space<vmem>>, %arg4: memref<1x4x256xf32, #tpu.memory_space<vmem>>) attributes {dimension_semantics = [#tpu.dimension_semantics<parallel>, #tpu.dimension_semantics<parallel>], iteration_bounds = array<i64: 2, 1>, scalar_prefetch = 0 : i64, scratch_operands = 0 : i64, tpu.core_type = #tpu.core_type<tc>, window_params = [{transform_indices = @transform_0, window_bounds = array<i64: 1, 4, 256>}, {transform_indices = @transform_1, window_bounds = array<i64: 1, 4, 256>}, {transform_indices = @transform_2, window_bounds = array<i64: 1, 4, 256>}]} {
    %c0 = arith.constant 0 : index
    %c0_0 = arith.constant 0 : index
    %c0_1 = arith.constant 0 : index
    %0 = vector.load %arg2[%c0, %c0_0, %c0_1] : memref<1x4x256xf32, #tpu.memory_space<vmem>>, vector<1x4x256xf32>
    %1 = vector.shape_cast %0 : vector<1x4x256xf32> to vector<4x256xf32>
    %c0_2 = arith.constant 0 : index
    %c0_3 = arith.constant 0 : index
    %c0_4 = arith.constant 0 : index
    %2 = vector.load %arg3[%c0_2, %c0_3, %c0_4] : memref<1x4x256xf32, #tpu.memory_space<vmem>>, vector<1x4x256xf32>
    %3 = vector.shape_cast %2 : vector<1x4x256xf32> to vector<4x256xf32>
    %cst = arith.constant dense<0.000000e+00> : vector<256xf32>
    %4 = vector.multi_reduction <add>, %1, %cst [0] : vector<4x256xf32> to vector<256xf32>
    %5 = vector.shape_cast %4 : vector<256xf32> to vector<1x256xf32>
    %cst_5 = arith.constant 4.000000e+00 : f32
    %6 = vector.broadcast %cst_5 : f32 to vector<1x256xf32>
    %7 = arith.divf %5, %6 : vector<1x256xf32>
    %8 = vector.broadcast %7 : vector<1x256xf32> to vector<4x256xf32>
    %9 = arith.subf %1, %8 : vector<4x256xf32>
    %10 = arith.mulf %9, %9 : vector<4x256xf32>
    %cst_6 = arith.constant dense<0.000000e+00> : vector<256xf32>
    %11 = vector.multi_reduction <add>, %10, %cst_6 [0] : vector<4x256xf32> to vector<256xf32>
    %12 = vector.shape_cast %11 : vector<256xf32> to vector<1x256xf32>
    %cst_7 = arith.constant 0.333333343 : f32
    %13 = vector.broadcast %cst_7 : f32 to vector<1x256xf32>
    %14 = arith.mulf %12, %13 : vector<1x256xf32>
    %15 = math.sqrt %14 : vector<1x256xf32>
    %cst_8 = arith.constant dense<0.000000e+00> : vector<256xf32>
    %16 = vector.multi_reduction <add>, %3, %cst_8 [0] : vector<4x256xf32> to vector<256xf32>
    %17 = vector.shape_cast %16 : vector<256xf32> to vector<1x256xf32>
    %cst_9 = arith.constant 4.000000e+00 : f32
    %18 = vector.broadcast %cst_9 : f32 to vector<1x256xf32>
    %19 = arith.divf %17, %18 : vector<1x256xf32>
    %20 = vector.broadcast %19 : vector<1x256xf32> to vector<4x256xf32>
    %21 = arith.subf %3, %20 : vector<4x256xf32>
    %22 = arith.mulf %21, %21 : vector<4x256xf32>
    %cst_10 = arith.constant dense<0.000000e+00> : vector<256xf32>
    %23 = vector.multi_reduction <add>, %22, %cst_10 [0] : vector<4x256xf32> to vector<256xf32>
    %24 = vector.shape_cast %23 : vector<256xf32> to vector<1x256xf32>
    %cst_11 = arith.constant 0.333333343 : f32
    %25 = vector.broadcast %cst_11 : f32 to vector<1x256xf32>
    %26 = arith.mulf %24, %25 : vector<1x256xf32>
    %27 = math.sqrt %26 : vector<1x256xf32>
    %cst_12 = arith.constant 9.99999993E-9 : f32
    %28 = vector.broadcast %cst_12 : f32 to vector<1x256xf32>
    %29 = arith.addf %15, %28 : vector<1x256xf32>
    %30 = tpu.reciprocal %29 : vector<1x256xf32> -> vector<1x256xf32>
    %31 = arith.mulf %27, %30 : vector<1x256xf32>
    %32 = vector.broadcast %7 : vector<1x256xf32> to vector<4x256xf32>
    %33 = arith.subf %1, %32 : vector<4x256xf32>
    %34 = vector.broadcast %31 : vector<1x256xf32> to vector<4x256xf32>
    %35 = arith.mulf %33, %34 : vector<4x256xf32>
    %36 = vector.broadcast %19 : vector<1x256xf32> to vector<4x256xf32>
    %37 = arith.addf %35, %36 : vector<4x256xf32>
    %c0_13 = arith.constant 0 : index
    %c0_14 = arith.constant 0 : index
    %c0_15 = arith.constant 0 : index
    %38 = vector.load %arg4[%c0_13, %c0_14, %c0_15] : memref<1x4x256xf32, #tpu.memory_space<vmem>>, vector<1x4x256xf32>
    %39 = vector.shape_cast %38 : vector<1x4x256xf32> to vector<4x256xf32>
    %40 = vector.shape_cast %37 : vector<4x256xf32> to vector<1x4x256xf32>
    tpu.vector_store %arg4[%c0_13, %c0_14, %c0_15], %40 {strides = array<i32>} : memref<1x4x256xf32, #tpu.memory_space<vmem>>, vector<1x4x256xf32>,
    return
  }
  func.func @transform_0(%arg0: i32, %arg1: i32) -> (i32, i32, i32) {
    %c0_i32 = arith.constant 0 : i32
    %c0_i32_0 = arith.constant 0 : i32
    return %arg0, %c0_i32, %arg1 : i32, i32, i32
  }
  func.func @transform_1(%arg0: i32, %arg1: i32) -> (i32, i32, i32) {
    %c0_i32 = arith.constant 0 : i32
    %c0_i32_0 = arith.constant 0 : i32
    return %arg0, %c0_i32, %arg1 : i32, i32, i32
  }
  func.func @transform_2(%arg0: i32, %arg1: i32) -> (i32, i32, i32) {
    %c0_i32 = arith.constant 0 : i32
    %c0_i32_0 = arith.constant 0 : i32
    return %arg0, %c0_i32, %arg1 : i32, i32, i32
  }
}

</mosaic_0001>

<llo_original>
// kernel: tpu_custom_call.1
$region0: #{tpu_custom_call.1}
  #allocation0 [shape = 'u32[]', space=smem, size = 0x4, offset = 0x4, fixed_abs, tag = 'smem constant byte address 0x4 - core index']
  #allocation1 [shape = 'u32[72,128]{1,0:T(1,128)}', space=vmem, size = 0x9000, scoped, tag = 'internal scratch']
  %s0 = inlined_call_operand.hbm [shape: f32[2,4,256], index: 0, kind: input, shape index: {}]
  %s1 = inlined_call_operand.hbm [shape: f32[2,4,256], index: 1, kind: input, shape index: {}]
  %s2 = inlined_call_operand.hbm [shape: f32[2,4,256], index: 2, kind: output, shape index: {}]
  %s3 = sld [smem:[#allocation0]]
  $region49: #{tpu_custom_call.1} parent=0
    _
  %s5 = ssub.s32 1, %s3
  %s6 = scalar_select 0, %s5, %s3
  $region1: #{tpu_custom_call.1} parent=0
    #allocation2 [shape = 'u8[8192]{0}', space=vmem, size = 0x2000, scoped, tag = 'input window, operand 0']
    #allocation3 [shape = 's32[2]{0}', space=sflag, size = 0x8, scoped, tag = 'scoped memory for tpu_custom_call.1']
    #allocation4 [shape = 's32[2]{0}', space=sflag, size = 0x8, scoped, tag = 'scoped memory for tpu_custom_call.1']
    #allocation5 [shape = 'u8[8192]{0}', space=vmem, size = 0x2000, scoped, tag = 'input window, operand 1']
    #allocation6 [shape = 's32[2]{0}', space=sflag, size = 0x8, scoped, tag = 'scoped memory for tpu_custom_call.1']
    #allocation7 [shape = 'u8[8192]{0}', space=vmem, size = 0x2000, scoped, tag = 'output window, operand 0']
    %7 = vsyncpa [#allocation3], 0
    %s8 = scalar_lea.sflag [#allocation3], 1
    %9 = vsyncpa %s8, 0
    %10 = vsyncpa [#allocation6], 0
    %s11 = scalar_lea.sflag [#allocation6], 1
    %12 = vsyncpa %s11, 0
    %13 = vsyncpa [#allocation4], 0
    %s14 = scalar_lea.sflag [#allocation4], 1
    %15 = vsyncpa %s14, 0
    loop: start=0, step=1, limit=4
    $region2: #{tpu_custom_call.1} parent=1 // loop_pre_header
      _
    $region3: #{tpu_custom_call.1} parent=1 // loop_header
      %s17 = sphi 0, %s21
      %p18 = scmp.ge.s32.totalorder %s17, 4
      %s24 = sphi 0, %s36
      %s25 = sphi 0, %s32
      %s26 = sphi 0, %s24
      %s27 = sphi 0, %s25
      %s28 = sphi 0, %s26
      %s29 = sphi 0, %s27
      %s41 = sphi 0, %s43
      %s44 = sphi 0, %s41
      %s45 = sphi 0, %s44
      %s61 = sphi 0, %s45
      %s69 = sphi 0, %s71
      %s72 = sphi 0, %s69
      %s73 = sphi 0, %s72
      %s89 = sphi 0, %s73
      %s97 = sphi 0, %s99
      %s100 = sphi 0, %s97
      %s101 = sphi 0, %s100
      %s117 = sphi 0, %s101
    $region4: #{tpu_custom_call.1} parent=1 // loop_header_branch
      %20 = sbr.rel (%p18) target = $region8
    $region5: #{tpu_custom_call.1} parent=1 // loop_body
      %s22 = ssub.s32 %s17, 1
      %s23 = ssub.s32 %s17, 2
      %s30 = sadd.s32 1, %s25
      %p31 = scmp.ge.s32.totalorder %s30, 1
      %s32 = scalar_select %p31, 0, %s30
      %s33 = sadd.s32 1, %s24
      %s34 = scalar_select %p31, %s33, %s24
      %p35 = scmp.ge.s32.totalorder %s34, 2
      %s36 = scalar_select %p35, 0, %s34
      %s37 = ssub.s32 %s24, %s36
      %s38 = ssub.s32 %s25, %s32
      %s39 = sor.u32 %s37, %s38
      %p40 = scmp.eq.s32.totalorder %s39, 0
      %s42 = sadd.s32 %s41, 1
      %s43 = scalar_select %p40, %s41, %s42
      %p46 = pneg %p40
      %p47 = scmp.eq.s32.totalorder %s17, 1
      %p48 = por %p46, %p47
      %p49 = scmp.ne.s32.totalorder %s41, %s44
      %p50 = scmp.eq.s32.totalorder %s17, 0
      %p51 = por %p49, %p50
      %p52 = scmp.ne.s32.totalorder %s41, %s44
      %p53 = scmp.eq.s32.totalorder %s22, 1
      %p54 = por %p52, %p53
      %p55 = scmp.ne.s32.totalorder %s44, %s45
      %p56 = scmp.eq.s32.totalorder %s22, 0
      %p57 = por %p55, %p56
      %p58 = scmp.ne.s32.totalorder %s44, %s45
      %p59 = scmp.eq.s32.totalorder %s23, 1
      %p60 = por %p58, %p59
      %p62 = scmp.ne.s32.totalorder %s45, %s61
      %p63 = scmp.eq.s32.totalorder %s23, 0
      %p64 = por %p62, %p63
      %s65 = ssub.s32 %s24, %s36
      %s66 = ssub.s32 %s25, %s32
      %s67 = sor.u32 %s65, %s66
      %p68 = scmp.eq.s32.totalorder %s67, 0
      %s70 = sadd.s32 %s69, 1
      %s71 = scalar_select %p68, %s69, %s70
      %p74 = pneg %p68
      %p75 = scmp.eq.s32.totalorder %s17, 1
      %p76 = por %p74, %p75
      %p77 = scmp.ne.s32.totalorder %s69, %s72
      %p78 = scmp.eq.s32.totalorder %s17, 0
      %p79 = por %p77, %p78
      %p80 = scmp.ne.s32.totalorder %s69, %s72
      %p81 = scmp.eq.s32.totalorder %s22, 1
      %p82 = por %p80, %p81
      %p83 = scmp.ne.s32.totalorder %s72, %s73
      %p84 = scmp.eq.s32.totalorder %s22, 0
      %p85 = por %p83, %p84
      %p86 = scmp.ne.s32.totalorder %s72, %s73
      %p87 = scmp.eq.s32.totalorder %s23, 1
      %p88 = por %p86, %p87
      %p90 = scmp.ne.s32.totalorder %s73, %s89
      %p91 = scmp.eq.s32.totalorder %s23, 0
      %p92 = por %p90, %p91
      %s93 = ssub.s32 %s24, %s36
      %s94 = ssub.s32 %s25, %s32
      %s95 = sor.u32 %s93, %s94
      %p96 = scmp.eq.s32.totalorder %s95, 0
      %s98 = sadd.s32 %s97, 1
      %s99 = scalar_select %p96, %s97, %s98
      %p102 = pneg %p96
      %p103 = scmp.eq.s32.totalorder %s17, 1
      %p104 = por %p102, %p103
      %p105 = scmp.ne.s32.totalorder %s97, %s100
      %p106 = scmp.eq.s32.totalorder %s17, 0
      %p107 = por %p105, %p106
      %p108 = scmp.ne.s32.totalorder %s97, %s100
      %p109 = scmp.eq.s32.totalorder %s22, 1
      %p110 = por %p108, %p109
      %p111 = scmp.ne.s32.totalorder %s100, %s101
      %p112 = scmp.eq.s32.totalorder %s22, 0
      %p113 = por %p111, %p112
      %p114 = scmp.ne.s32.totalorder %s100, %s101
      %p115 = scmp.eq.s32.totalorder %s23, 1
      %p116 = por %p114, %p115
      %p118 = scmp.ne.s32.totalorder %s101, %s117
      %p119 = scmp.eq.s32.totalorder %s23, 0
      %p120 = por %p118, %p119
      %p121 = scmp.le.s32.totalorder 1, %s17
      %p122 = scmp.lt.s32.totalorder %s17, 3
      %p123 = pnand %p121, %p122
      %p124 = pneg %p123
      // Predicated region
      $region9: #{tpu_custom_call.1} parent=5 // pred_check
        _
      $region10: #{tpu_custom_call.1} parent=5 // pred_check_branch
        %126 = sbr.rel (%p123) target = $region12
      $region11: #{tpu_custom_call.1} parent=5 // pred_region
        %s127 = ssub.s32 %s17, 1
      $region12: #{tpu_custom_call.1} parent=5 // pred_fallthru
        _
      %p128 = scmp.lt.s32.totalorder %s17, 2
      // Predicated region
      $region13: #{tpu_custom_call.1} parent=5 // pred_check
        %p129 = pneg %p128
      $region14: #{tpu_custom_call.1} parent=5 // pred_check_branch
        %131 = sbr.rel (%p129) target = $region16
      $region15: #{tpu_custom_call.1} parent=5 // pred_region
        // Predicated region
        $region17: #{tpu_custom_call.1} parent=15 // pred_check
          %p132 = pneg %p51
        $region18: #{tpu_custom_call.1} parent=15 // pred_check_branch
          %134 = sbr.rel (%p132) target = $region20
        $region19: #{tpu_custom_call.1} parent=15 // pred_region
          %s135 = sand.u32 %s41, 1
          %s136 = scalar_lea.sflag [#allocation3], %s135
          %s137 = sand.u32 %s41, 1
          %s138 = smul.addr %s137, 8
          %s139 = scalar_lea.vmem [#allocation2], %s138
          %s140 = smul.u32 2, %s25
          %142 = vsyncadd %s136, 0
          %s143 = smul.addr %s24, 2
          %s144 = sadd.s32 %s140, %s143
          %s145 = smul.addr %s144, 4
          %s146 = scalar_lea.hbm %s0, %s145
          %s148 = sshll.u32 %s146, 4
          %s149 = int_to_ptr.hbm [resolvable:$true] %s148
          %s150 = sshll.u32 %s139, 4
          %s151 = int_to_ptr.vmem [resolvable:$true] %s150
          %153 = dma.hbm_to_vmem [thread:$0]  %s149, 128, %s151, %s136
        $region20: #{tpu_custom_call.1} parent=15 // pred_fallthru
          _
        // Predicated region
        $region21: #{tpu_custom_call.1} parent=15 // pred_check
          %p154 = pneg %p79
        $region22: #{tpu_custom_call.1} parent=15 // pred_check_branch
          %156 = sbr.rel (%p154) target = $region24
        $region23: #{tpu_custom_call.1} parent=15 // pred_region
          %s157 = sand.u32 %s69, 1
          %s158 = scalar_lea.sflag [#allocation6], %s157
          %s159 = sand.u32 %s69, 1
          %s160 = smul.addr %s159, 8
          %s161 = scalar_lea.vmem [#allocation5], %s160
          %s162 = smul.u32 2, %s25
          %164 = vsyncadd %s158, 0
          %s165 = smul.addr %s24, 2
          %s166 = sadd.s32 %s162, %s165
          %s167 = smul.addr %s166, 4
          %s168 = scalar_lea.hbm %s1, %s167
          %s170 = sshll.u32 %s168, 4
          %s171 = int_to_ptr.hbm [resolvable:$true] %s170
          %s172 = sshll.u32 %s161, 4
          %s173 = int_to_ptr.vmem [resolvable:$true] %s172
          %175 = dma.hbm_to_vmem [thread:$0]  %s171, 128, %s173, %s158
        $region24: #{tpu_custom_call.1} parent=15 // pred_fallthru
          _
      $region16: #{tpu_custom_call.1} parent=5 // pred_fallthru
        _
      %p176 = scmp.le.s32.totalorder 1, %s17
      %p177 = scmp.lt.s32.totalorder %s17, 3
      %p178 = pnand %p176, %p177
      %p179 = pneg %p178
      // Predicated region
      $region25: #{tpu_custom_call.1} parent=5 // pred_check
        _
      $region26: #{tpu_custom_call.1} parent=5 // pred_check_branch
        %181 = sbr.rel (%p178) target = $region28
      $region27: #{tpu_custom_call.1} parent=5 // pred_region
        %s182 = ssub.s32 %s17, 1
        %s183 = sand.u32 %s44, 1
        %s184 = scalar_lea.sflag [#allocation3], %s183
        %s185 = sand.u32 %s44, 1
        %s186 = smul.addr %s185, 8
        %s187 = scalar_lea.vmem [#allocation2], %s186
        // Predicated region
        $region29: #{tpu_custom_call.1} parent=27 // pred_check
          %p188 = pneg %p57
        $region30: #{tpu_custom_call.1} parent=27 // pred_check_branch
          %190 = sbr.rel (%p188) target = $region32
        $region31: #{tpu_custom_call.1} parent=27 // pred_region
          %192 = dma.done %s184, 128
        $region32: #{tpu_custom_call.1} parent=27 // pred_fallthru
          _
        %s193 = sand.u32 %s72, 1
        %s194 = scalar_lea.sflag [#allocation6], %s193
        %s195 = sand.u32 %s72, 1
        %s196 = smul.addr %s195, 8
        %s197 = scalar_lea.vmem [#allocation5], %s196
        // Predicated region
        $region33: #{tpu_custom_call.1} parent=27 // pred_check
          %p198 = pneg %p85
        $region34: #{tpu_custom_call.1} parent=27 // pred_check_branch
          %200 = sbr.rel (%p198) target = $region36
        $region35: #{tpu_custom_call.1} parent=27 // pred_region
          %202 = dma.done %s194, 128
        $region36: #{tpu_custom_call.1} parent=27 // pred_fallthru
          _
        %s203 = sand.u32 %s44, 1
        %s204 = scalar_lea.sflag [#allocation3], %s203
        %s205 = sand.u32 %s44, 1
        %s206 = smul.addr %s205, 8
        %s207 = scalar_lea.vmem [#allocation2], %s206
        %p208 = pneg %p57
        %p209 = pneg %p54
        %s210 = sand.u32 %s72, 1
        %s211 = scalar_lea.sflag [#allocation6], %s210
        %s212 = sand.u32 %s72, 1
        %s213 = smul.addr %s212, 8
        %s214 = scalar_lea.vmem [#allocation5], %s213
        %p215 = pneg %p85
        %p216 = pneg %p82
        %p217 = pneg %p113
        %p218 = pneg %p110
        %s219 = sand.u32 %s100, 1
        %s220 = scalar_lea.sflag [#allocation4], %s219
        %s221 = sand.u32 %s100, 1
        %s222 = smul.addr %s221, 8
        %s223 = scalar_lea.vmem [#allocation7], %s222
        %s224 = smul.u32 2, %s27
        %s225 = smul.u32 2, %s27
        %s226 = smul.u32 2, %s27
        %v227 = vld [vmem:[%s187] sm:$0xff]
        %v228 = vld [vmem:[%s197] sm:$0xff]
        %230 = vst [vmem:[#allocation1] ss:$2 sm:$0xff] %v227
        %v231 = vld.sshfl [vmem:[#allocation1] sm:$0xff pattern:$0x75316420]
        %v232 = vld.sshfl [vmem:[#allocation1 + $0x8] sm:$0xff pattern:$0x75316420]
        %vm235 = vcmask 1043456
        %v236 = vsel %vm235, %v231, 0.0
        %v237 = vrot.slane %v236, 4
        %v238 = vadd.f32 %v236, %v237
        %v239 = vrot.slane %v238, 2
        %v240 = vadd.f32 %v238, %v239
        %v241 = vrot.slane %v240, 1
        %v242 = vadd.f32 %v240, %v241
        %v243 = vsel %vm235, %v232, 0.0
        %v244 = vrot.slane %v243, 4
        %v245 = vadd.f32 %v243, %v244
        %v246 = vrot.slane %v245, 2
        %v247 = vadd.f32 %v245, %v246
        %v248 = vrot.slane %v247, 1
        %v249 = vadd.f32 %v247, %v248
        %v250 = vrcp.pop 4.0
        %v251 = vmul.f32 4.0, %v250
        %v252 = vsub.f32 1.0, %v251
        %v253 = vmul.f32 %v250, %v252
        %v254 = vadd.f32 %v250, %v253
        %vm255 = vweird.f32 %v250
        %v256 = vsel %vm255, %v250, %v254
        %v257 = vmul.f32 %v242, %v256
        %v258 = vmul.f32 %v249, %v256
        %v261 = vrot.slane %v258, 4
        %v262 = vsel %vm235, %v257, %v261
        %v264 = vsub.f32 %v227, %v262
        %v265 = vmul.f32 %v264, %v264
        %267 = vst [vmem:[#allocation1] ss:$2 sm:$0xff] %v265
        %v268 = vld.sshfl [vmem:[#allocation1] sm:$0xff pattern:$0x75316420]
        %v269 = vld.sshfl [vmem:[#allocation1 + $0x8] sm:$0xff pattern:$0x75316420]
        %v272 = vsel %vm235, %v268, 0.0
        %v273 = vrot.slane %v272, 4
        %v274 = vadd.f32 %v272, %v273
        %v275 = vrot.slane %v274, 2
        %v276 = vadd.f32 %v274, %v275
        %v277 = vrot.slane %v276, 1
        %v278 = vadd.f32 %v276, %v277
        %v279 = vsel %vm235, %v269, 0.0
        %v280 = vrot.slane %v279, 4
        %v281 = vadd.f32 %v279, %v280
        %v282 = vrot.slane %v281, 2
        %v283 = vadd.f32 %v281, %v282
        %v284 = vrot.slane %v283, 1
        %v285 = vadd.f32 %v283, %v284
        %v286 = vmul.f32 %v278, 0.33333334
        %v287 = vmul.f32 %v285, 0.33333334
        %v288 = vrsqrt.pop %v286
        %v289 = vmul.f32 %v288, %v286
        %v290 = vmul.f32 %v289, %v288
        %v291 = vmul.f32 0.5, %v290
        %v292 = vsub.f32 1.5, %v291
        %v293 = vmul.f32 %v288, %v292
        %v294 = vmul.f32 %v286, %v293
        %vm295 = vcmp.eq.f32.partialorder %v286, inf
        %v296 = vsel %vm295, %v286, %v294
        %vm297 = vcmp.eq.f32.partialorder %v286, 0.0
        %v298 = vand.u32 %v286, 2147483648
        %v299 = vsel %vm297, %v298, %v296
        %v300 = vrsqrt.pop %v287
        %v301 = vmul.f32 %v300, %v287
        %v302 = vmul.f32 %v301, %v300
        %v303 = vmul.f32 0.5, %v302
        %v304 = vsub.f32 1.5, %v303
        %v305 = vmul.f32 %v300, %v304
        %v306 = vmul.f32 %v287, %v305
        %vm307 = vcmp.eq.f32.partialorder %v287, inf
        %v308 = vsel %vm307, %v287, %v306
        %vm309 = vcmp.eq.f32.partialorder %v287, 0.0
        %v310 = vand.u32 %v287, 2147483648
        %v311 = vsel %vm309, %v310, %v308
        %313 = vst [vmem:[#allocation1] ss:$2 sm:$0xff] %v228
        %v314 = vld.sshfl [vmem:[#allocation1] sm:$0xff pattern:$0x75316420]
        %v315 = vld.sshfl [vmem:[#allocation1 + $0x8] sm:$0xff pattern:$0x75316420]
        %v318 = vsel %vm235, %v314, 0.0
        %v319 = vrot.slane %v318, 4
        %v320 = vadd.f32 %v318, %v319
        %v321 = vrot.slane %v320, 2
        %v322 = vadd.f32 %v320, %v321
        %v323 = vrot.slane %v322, 1
        %v324 = vadd.f32 %v322, %v323
        %v325 = vsel %vm235, %v315, 0.0
        %v326 = vrot.slane %v325, 4
        %v327 = vadd.f32 %v325, %v326
        %v328 = vrot.slane %v327, 2
        %v329 = vadd.f32 %v327, %v328
        %v330 = vrot.slane %v329, 1
        %v331 = vadd.f32 %v329, %v330
        %v332 = vmul.f32 %v324, %v256
        %v333 = vmul.f32 %v331, %v256
        %v336 = vrot.slane %v333, 4
        %v337 = vsel %vm235, %v332, %v336
        %v339 = vsub.f32 %v228, %v337
        %v340 = vmul.f32 %v339, %v339
        %342 = vst [vmem:[#allocation1] ss:$2 sm:$0xff] %v340
        %v343 = vld.sshfl [vmem:[#allocation1] sm:$0xff pattern:$0x75316420]
        %v344 = vld.sshfl [vmem:[#allocation1 + $0x8] sm:$0xff pattern:$0x75316420]
        %v347 = vsel %vm235, %v343, 0.0
        %v348 = vrot.slane %v347, 4
        %v349 = vadd.f32 %v347, %v348
        %v350 = vrot.slane %v349, 2
        %v351 = vadd.f32 %v349, %v350
        %v352 = vrot.slane %v351, 1
        %v353 = vadd.f32 %v351, %v352
        %v354 = vsel %vm235, %v344, 0.0
        %v355 = vrot.slane %v354, 4
        %v356 = vadd.f32 %v354, %v355
        %v357 = vrot.slane %v356, 2
        %v358 = vadd.f32 %v356, %v357
        %v359 = vrot.slane %v358, 1
        %v360 = vadd.f32 %v358, %v359
        %v361 = vmul.f32 %v353, 0.33333334
        %v362 = vmul.f32 %v360, 0.33333334
        %v363 = vrsqrt.pop %v361
        %v364 = vmul.f32 %v363, %v361
        %v365 = vmul.f32 %v364, %v363
        %v366 = vmul.f32 0.5, %v365
        %v367 = vsub.f32 1.5, %v366
        %v368 = vmul.f32 %v363, %v367
        %v369 = vmul.f32 %v361, %v368
        %vm370 = vcmp.eq.f32.partialorder %v361, inf
        %v371 = vsel %vm370, %v361, %v369
        %vm372 = vcmp.eq.f32.partialorder %v361, 0.0
        %v373 = vand.u32 %v361, 2147483648
        %v374 = vsel %vm372, %v373, %v371
        %v375 = vrsqrt.pop %v362
        %v376 = vmul.f32 %v375, %v362
        %v377 = vmul.f32 %v376, %v375
        %v378 = vmul.f32 0.5, %v377
        %v379 = vsub.f32 1.5, %v378
        %v380 = vmul.f32 %v375, %v379
        %v381 = vmul.f32 %v362, %v380
        %vm382 = vcmp.eq.f32.partialorder %v362, inf
        %v383 = vsel %vm382, %v362, %v381
        %vm384 = vcmp.eq.f32.partialorder %v362, 0.0
        %v385 = vand.u32 %v362, 2147483648
        %v386 = vsel %vm384, %v385, %v383
        %v387 = vadd.f32 %v299, 1e-08
        %v388 = vadd.f32 %v311, 1e-08
        %v389 = vrcp.pop %v387
        %v390 = vmul.f32 %v387, %v389
        %v391 = vsub.f32 1.0, %v390
        %v392 = vmul.f32 %v389, %v391
        %v393 = vadd.f32 %v389, %v392
        %vm394 = vweird.f32 %v387
        %vm395 = vweird.f32 %v389
        %vm396 = vmor %vm394, %vm395
        %v397 = vsel %vm396, %v389, %v393
        %v398 = vand.u32 2147483647, %v387
        %vm399 = vcmp.eq.f32.partialorder %v398, 8.507059e+37
        %v400 = vand.u32 %v387, 2147483648
        %v401 = vor.u32 1.1754944e-38, %v400
        %v402 = vsel %vm399, %v401, %v397
        %v403 = vrcp.pop %v388
        %v404 = vmul.f32 %v388, %v403
        %v405 = vsub.f32 1.0, %v404
        %v406 = vmul.f32 %v403, %v405
        %v407 = vadd.f32 %v403, %v406
        %vm408 = vweird.f32 %v388
        %vm409 = vweird.f32 %v403
        %vm410 = vmor %vm408, %vm409
        %v411 = vsel %vm410, %v403, %v407
        %v412 = vand.u32 2147483647, %v388
        %vm413 = vcmp.eq.f32.partialorder %v412, 8.507059e+37
        %v414 = vand.u32 %v388, 2147483648
        %v415 = vor.u32 1.1754944e-38, %v414
        %v416 = vsel %vm413, %v415, %v411
        %v417 = vmul.f32 %v374, %v402
        %v418 = vmul.f32 %v386, %v416
        %v421 = vrot.slane %v418, 4
        %v422 = vsel %vm235, %v417, %v421
        %v424 = vmul.f32 %v264, %v422
        %v425 = vadd.f32 %v424, %v337
        %426 = vst [vmem:[%s223] sm:$0xff] %v425
        %s427 = sand.u32 %s100, 1
        %s428 = scalar_lea.sflag [#allocation4], %s427
        %s429 = sand.u32 %s100, 1
        %s430 = smul.addr %s429, 8
        %s431 = scalar_lea.vmem [#allocation7], %s430
        // Predicated region
        $region37: #{tpu_custom_call.1} parent=27 // pred_check
          %p432 = pneg %p110
        $region38: #{tpu_custom_call.1} parent=27 // pred_check_branch
          %434 = sbr.rel (%p432) target = $region40
        $region39: #{tpu_custom_call.1} parent=27 // pred_region
          %s435 = smul.u32 2, %s27
          %437 = vsyncadd %s428, 0
          %s438 = smul.addr %s26, 2
          %s439 = sadd.s32 %s435, %s438
          %s440 = smul.addr %s439, 4
          %s441 = scalar_lea.hbm %s2, %s440
          %s443 = sshll.u32 %s431, 4
          %s444 = int_to_ptr.vmem [resolvable:$true] %s443
          %s445 = sshll.u32 %s441, 4
          %s446 = int_to_ptr.hbm [resolvable:$true] %s445
          %448 = dma.vmem_to_hbm [thread:$0]  %s444, 128, %s446, %s428
        $region40: #{tpu_custom_call.1} parent=27 // pred_fallthru
          _
      $region28: #{tpu_custom_call.1} parent=5 // pred_fallthru
        _
      %p449 = scmp.le.s32.totalorder 2, %s17
      // Predicated region
      $region41: #{tpu_custom_call.1} parent=5 // pred_check
        %p450 = pneg %p449
      $region42: #{tpu_custom_call.1} parent=5 // pred_check_branch
        %452 = sbr.rel (%p450) target = $region44
      $region43: #{tpu_custom_call.1} parent=5 // pred_region
        %s453 = ssub.s32 %s17, 2
        // Predicated region
        $region45: #{tpu_custom_call.1} parent=43 // pred_check
          %p454 = pneg %p116
        $region46: #{tpu_custom_call.1} parent=43 // pred_check_branch
          %456 = sbr.rel (%p454) target = $region48
        $region47: #{tpu_custom_call.1} parent=43 // pred_region
          %s457 = sand.u32 %s101, 1
          %s458 = scalar_lea.sflag [#allocation4], %s457
          %s459 = sand.u32 %s101, 1
          %s460 = smul.addr %s459, 8
          %s461 = scalar_lea.vmem [#allocation7], %s460
          %463 = dma.done %s458, 128
        $region48: #{tpu_custom_call.1} parent=43 // pred_fallthru
          _
      $region44: #{tpu_custom_call.1} parent=5 // pred_fallthru
        _
    $region6: #{tpu_custom_call.1} parent=1 // loop_footer
      %s21 = sadd.s32 1, %s17
    $region7: #{tpu_custom_call.1} parent=1 // loop_footer_branch
      %16 = sbr.rel target = $region3
    $region8: #{tpu_custom_call.1} parent=1 // loop_exit
      _
    %464 = vsyncpa [#allocation3], 1
    %s465 = scalar_lea.sflag [#allocation3], 1
    %466 = vsyncpa %s465, 1
    %467 = vsyncpa [#allocation6], 1
    %s468 = scalar_lea.sflag [#allocation6], 1
    %469 = vsyncpa %s468, 1
    %470 = vsyncpa [#allocation4], 1
    %s471 = scalar_lea.sflag [#allocation4], 1
    %472 = vsyncpa %s471, 1

</llo_original>
